<compile_context>
chip_gen: v7x
topology: tpu7x:2x2x1
jax: 0.10.0
libtpu: 0.0.40
codegen_flags: <defaults>
</compile_context>

<pallas_src>
import math

import jax
import jax.numpy as jnp
from jax.experimental import pallas as pl
from jax.experimental.pallas import tpu as pltpu


def _round_up(x, m):
    return ((x + m - 1) // m) * m


def _round_down(x, m):
    return (x // m) * m


def _vmem_capacity_bytes():
    """Physical VMEM of the local TPU generation (conservative fallback)."""
    try:
        info = pltpu.get_tpu_info()
        cap = getattr(info, "vmem_capacity_bytes", None)
        if cap:
            return int(cap)
    except Exception:
        pass
    return 64 << 20  # v7x-sized fallback: safe on every generation


def _pos_emb_kernel(pos_ref, e_ref, phase_ref, out_ref):
    """One grid step.

    pos_ref  : [R, pack]   packed positions (pack consecutive per row)
    e_ref    : [pack, W]   block-diagonal inverse-frequency matrix,
                           E[k, k*H + j] = inv_freq[j % (H//2)], zeros elsewhere
    phase_ref: [1, W]      0 for sin columns, pi/2 for cos columns
    out_ref  : [R, W]      W = pack * H  (multiple of 128 lanes)
    """
    pack = pos_ref.shape[1]
    pos = pos_ref[...]
    e = e_ref[...]
    # Dense angle block.  Every output column has exactly one non-zero term,
    # so this accumulation is a bit-exact f32 outer product done as pure
    # lane-dense VPU work (pack is small: 1 for H>=128, 4 for H=32, ...).
    angles = pos[:, 0:1] * e[0:1, :]
    for k in range(1, pack):
        angles = angles + pos[:, k : k + 1] * e[k : k + 1, :]
    # Single full-width transcendental: cos(x) == sin(x + pi/2).
    out_ref[...] = jnp.sin(angles + phase_ref[...]).astype(out_ref.dtype)


def positional_embedding(
    pos_seq,
    hidden_size,
    *,
    out_dtype=jnp.float32,       # keep f32 to match reference; bf16 is opt-in
    target_step_bytes=4 << 20,   # ~4 MiB of output per grid step
):
    """Pallas forward pass.  pos_seq: [B, L] float -> [B, L, hidden_size]."""
    assert hidden_size % 2 == 0, "hidden_size must be even"
    B, L = pos_seq.shape
    h_half = hidden_size // 2
    N = B * L

    # ---- host-side constants --------------------------------------------
    inv_freq = 1.0 / (
        10000.0
        ** (jnp.arange(0.0, hidden_size, 2.0, dtype=jnp.float32) / hidden_size)
    )                                                    # [h_half]
    freq_full = jnp.concatenate([inv_freq, inv_freq])    # [H]: same angle for sin & cos cols

    pack = 128 // math.gcd(hidden_size, 128)
    packed_w = pack * hidden_size                        # multiple of 128 lanes

    # Block-diagonal frequency matrix and the sin/cos phase row.
    e_mat = jnp.kron(jnp.eye(pack, dtype=jnp.float32), freq_full[None, :])  # [pack, W]
    phase_row = jnp.concatenate(
        [jnp.zeros((h_half,), jnp.float32),
         jnp.full((h_half,), math.pi / 2, dtype=jnp.float32)]
    )
    phase = jnp.tile(phase_row, pack)[None, :]           # [1, W]

    # ---- tile selection: byte-targeted, generation/VMEM aware ------------
    out_itemsize = jnp.dtype(out_dtype).itemsize
    row_out_bytes = hidden_size * out_itemsize           # output bytes per position
    base = 8 * pack                                      # 8 sublanes of packed rows
    n_ceil = _round_up(N, base)

    # Per-position VMEM footprint: double-buffered pos (f32) + output tile,
    # plus a generous allowance for the in-kernel f32 angle/sin temporaries.
    bytes_per_pos = 2 * 4 + 2 * row_out_bytes + 12 * hidden_size
    vmem_cap = _vmem_capacity_bytes()
    budget = min(vmem_cap // 3, 40 << 20)                # ~40 MiB v5e/v6e, ~21 MiB v7x
    cap_rows = max(base, _round_down(budget // bytes_per_pos, base))

    target_rows = _round_up(
        max(base, target_step_bytes // max(row_out_bytes, 1)), base
    )
    tile_n = max(base, min(target_rows, cap_rows, n_ceil))
    grid_n = pl.cdiv(n_ceil, tile_n)

    # Prefer >= 4 pipelined steps (keeps both v7x TensorCores busy and the
    # prologue/epilogue DMAs overlapped) when each step still writes >=256 KiB.
    if grid_n < 4:
        want = _round_up(pl.cdiv(n_ceil, 4), base)
        if want < tile_n and want * row_out_bytes >= (256 << 10):
            tile_n = want
            grid_n = pl.cdiv(n_ceil, tile_n)

    n_pad = grid_n * tile_n
    rows_per_tile = tile_n // pack

    # ---- pack & pad the positions -----------------------------------------
    pos_flat = pos_seq.reshape(N).astype(jnp.float32)
    if n_pad != N:
        pos_flat = jnp.pad(pos_flat, (0, n_pad - N))     # padded rows dropped below
    pos_packed = pos_flat.reshape(n_pad // pack, pack)

    # Scoped-VMEM limit: cover the chosen tile comfortably, stay below physical.
    resident_bytes = 4 * (pack + 1) * packed_w * 2
    footprint = tile_n * bytes_per_pos + resident_bytes + (2 << 20)
    vmem_limit = int(
        min(max(footprint + (8 << 20), 32 << 20), max(32 << 20, vmem_cap - (4 << 20)))
    )

    out_packed = pl.pallas_call(
        _pos_emb_kernel,
        out_shape=jax.ShapeDtypeStruct((n_pad // pack, packed_w), out_dtype),
        grid_spec=pltpu.PrefetchScalarGridSpec(
            num_scalar_prefetch=0,
            grid=(grid_n,),
            in_specs=[
                pl.BlockSpec((rows_per_tile, pack), lambda i: (i, 0)),
                pl.BlockSpec((pack, packed_w), lambda i: (0, 0)),   # resident constant
                pl.BlockSpec((1, packed_w), lambda i: (0, 0)),      # resident constant
            ],
            out_specs=pl.BlockSpec((rows_per_tile, packed_w), lambda i: (i, 0)),
        ),
        compiler_params=pltpu.CompilerParams(
            dimension_semantics=("parallel",),
            vmem_limit_bytes=vmem_limit,
        ),
    )(pos_packed, e_mat, phase)

    # Packed rows are row-major identical to [n_pad, H] -> free reshapes.
    out = out_packed.reshape(n_pad, hidden_size)[:N]
    return out.reshape(B, L, hidden_size)


def reference_forward(pos_seq, hidden_size):
    B, L = pos_seq.shape
    inv_freq = 1.0 / (
        10000.0
        ** (jnp.arange(0.0, hidden_size, 2.0, dtype=jnp.float32) / hidden_size)
    )
    sinusoid = pos_seq.reshape(-1)[:, None] * inv_freq[None, :]
    emb = jnp.concatenate([jnp.sin(sinusoid), jnp.cos(sinusoid)], axis=-1)
    return emb.reshape(B, L, hidden_size)


if __name__ == "__main__":
    hidden_size = 32
    B, L = 2, 8

    key = jax.random.PRNGKey(0)
    # Deterministic example positions (Transformer-XL normally passes an
    # arange of relative positions; random floats exercise the same math).
    pos_seq = jax.random.uniform(
        key, (B, L), dtype=jnp.float32, minval=0.0, maxval=64.0
    )

    y = positional_embedding(pos_seq, hidden_size)
    y = jax.block_until_ready(y)

    y_ref = reference_forward(pos_seq, hidden_size)
    assert y.shape == (B, L, hidden_size), y.shape
    # cos is computed as sin(x + pi/2): identical angles (bit-exact f32 outer
    # product), only the f32 pi/2 constant differs -> ~4e-6 worst case here.
    err = float(jnp.max(jnp.abs(y - y_ref)))
    assert err < 2e-5, err

    print("KERNEL_OK")
</pallas_src>

<mosaic_0001>
module attributes {stable_mosaic.version = 11 : i64} {
  func.func @_pos_emb_kernel(%arg0: i32, %arg1: memref<8x4xf32, #tpu.memory_space<vmem>>, %arg2: memref<4x128xf32, #tpu.memory_space<vmem>>, %arg3: memref<1x128xf32, #tpu.memory_space<vmem>>, %arg4: memref<8x128xf32, #tpu.memory_space<vmem>>) attributes {dimension_semantics = [#tpu.dimension_semantics<parallel>], iteration_bounds = array<i64: 1>, scalar_prefetch = 0 : i64, scratch_operands = 0 : i64, tpu.core_type = #tpu.core_type<tc>, window_params = [{transform_indices = @transform_0, window_bounds = array<i64: 8, 4>}, {pipeline_mode = #tpu.pipeline_mode<synchronous>, transform_indices = @transform_1, window_bounds = array<i64: 4, 128>}, {pipeline_mode = #tpu.pipeline_mode<synchronous>, transform_indices = @transform_2, window_bounds = array<i64: 1, 128>}, {transform_indices = @transform_3, window_bounds = array<i64: 8, 128>}]} {
    %c0 = arith.constant 0 : index
    %c0_0 = arith.constant 0 : index
    %0 = vector.load %arg1[%c0, %c0_0] : memref<8x4xf32, #tpu.memory_space<vmem>>, vector<8x4xf32>
    %c0_1 = arith.constant 0 : index
    %c0_2 = arith.constant 0 : index
    %1 = vector.load %arg2[%c0_1, %c0_2] : memref<4x128xf32, #tpu.memory_space<vmem>>, vector<4x128xf32>
    %2 = vector.extract_strided_slice %0 {offsets = [0, 0], sizes = [8, 1], strides = [1, 1]} : vector<8x4xf32> to vector<8x1xf32>
    %3 = vector.extract_strided_slice %1 {offsets = [0, 0], sizes = [1, 128], strides = [1, 1]} : vector<4x128xf32> to vector<1x128xf32>
    %4 = vector.broadcast %2 : vector<8x1xf32> to vector<8x128xf32>
    %5 = vector.broadcast %3 : vector<1x128xf32> to vector<8x128xf32>
    %6 = arith.mulf %4, %5 : vector<8x128xf32>
    %7 = vector.extract_strided_slice %0 {offsets = [0, 1], sizes = [8, 1], strides = [1, 1]} : vector<8x4xf32> to vector<8x1xf32>
    %8 = vector.extract_strided_slice %1 {offsets = [1, 0], sizes = [1, 128], strides = [1, 1]} : vector<4x128xf32> to vector<1x128xf32>
    %9 = vector.broadcast %7 : vector<8x1xf32> to vector<8x128xf32>
    %10 = vector.broadcast %8 : vector<1x128xf32> to vector<8x128xf32>
    %11 = arith.mulf %9, %10 : vector<8x128xf32>
    %12 = arith.addf %6, %11 : vector<8x128xf32>
    %13 = vector.extract_strided_slice %0 {offsets = [0, 2], sizes = [8, 1], strides = [1, 1]} : vector<8x4xf32> to vector<8x1xf32>
    %14 = vector.extract_strided_slice %1 {offsets = [2, 0], sizes = [1, 128], strides = [1, 1]} : vector<4x128xf32> to vector<1x128xf32>
    %15 = vector.broadcast %13 : vector<8x1xf32> to vector<8x128xf32>
    %16 = vector.broadcast %14 : vector<1x128xf32> to vector<8x128xf32>
    %17 = arith.mulf %15, %16 : vector<8x128xf32>
    %18 = arith.addf %12, %17 : vector<8x128xf32>
    %19 = vector.extract_strided_slice %0 {offsets = [0, 3], sizes = [8, 1], strides = [1, 1]} : vector<8x4xf32> to vector<8x1xf32>
    %20 = vector.extract_strided_slice %1 {offsets = [3, 0], sizes = [1, 128], strides = [1, 1]} : vector<4x128xf32> to vector<1x128xf32>
    %21 = vector.broadcast %19 : vector<8x1xf32> to vector<8x128xf32>
    %22 = vector.broadcast %20 : vector<1x128xf32> to vector<8x128xf32>
    %23 = arith.mulf %21, %22 : vector<8x128xf32>
    %24 = arith.addf %18, %23 : vector<8x128xf32>
    %c0_3 = arith.constant 0 : index
    %c0_4 = arith.constant 0 : index
    %25 = vector.load %arg3[%c0_3, %c0_4] : memref<1x128xf32, #tpu.memory_space<vmem>>, vector<1x128xf32>
    %26 = vector.broadcast %25 : vector<1x128xf32> to vector<8x128xf32>
    %27 = arith.addf %24, %26 : vector<8x128xf32>
    %28 = math.sin %27 : vector<8x128xf32>
    %c0_5 = arith.constant 0 : index
    %c0_6 = arith.constant 0 : index
    %29 = vector.load %arg4[%c0_5, %c0_6] : memref<8x128xf32, #tpu.memory_space<vmem>>, vector<8x128xf32>
    tpu.vector_store %arg4[%c0_5, %c0_6], %28 {strides = array<i32>} : memref<8x128xf32, #tpu.memory_space<vmem>>, vector<8x128xf32>,
    return
  }
  func.func @transform_0(%arg0: i32) -> (i32, i32) {
    %c0_i32 = arith.constant 0 : i32
    %c0_i32_0 = arith.constant 0 : i32
    return %arg0, %c0_i32 : i32, i32
  }
  func.func @transform_1(%arg0: i32) -> (i32, i32) {
    %c0_i32 = arith.constant 0 : i32
    %c0_i32_0 = arith.constant 0 : i32
    %c0_i32_1 = arith.constant 0 : i32
    return %c0_i32, %c0_i32_0 : i32, i32
  }
  func.func @transform_2(%arg0: i32) -> (i32, i32) {
    %c0_i32 = arith.constant 0 : i32
    %c0_i32_0 = arith.constant 0 : i32
    %c0_i32_1 = arith.constant 0 : i32
    return %c0_i32, %c0_i32_0 : i32, i32
  }
  func.func @transform_3(%arg0: i32) -> (i32, i32) {
    %c0_i32 = arith.constant 0 : i32
    %c0_i32_0 = arith.constant 0 : i32
    return %arg0, %c0_i32 : i32, i32
  }
}

</mosaic_0001>

<llo_original>
// kernel: tpu_custom_call.1
$region0: #{tpu_custom_call.1}
  #allocation0 [shape = 'u32[]', space=smem, size = 0x4, offset = 0x4, fixed_abs, tag = 'smem constant byte address 0x4 - core index']
  #allocation1 [shape = 'u32[144,128]{1,0:T(1,128)}', space=vmem, size = 0x12000, scoped, tag = 'internal scratch']
  %s0 = inlined_call_operand.vmem [shape: f32[8,4], index: 0, kind: input, shape index: {}]
  %s1 = inlined_call_operand.vmem [shape: f32[4,128], index: 1, kind: input, shape index: {}]
  %s2 = inlined_call_operand.vmem [shape: f32[1,128], index: 2, kind: input, shape index: {}]
  %s3 = inlined_call_operand.hbm [shape: f32[8,128], index: 3, kind: output, shape index: {}]
  %s4 = sld [smem:[#allocation0]]
  $region22: #{tpu_custom_call.1} parent=0
    _
  %s6 = ssub.s32 1, %s4
  %s7 = scalar_select 0, %s6, %s4
  $region1: #{tpu_custom_call.1} parent=0
    #allocation2 [shape = 'u8[4096]{0}', space=vmem, size = 0x1000, scoped, tag = 'output window, operand 0, single buffered']
    #allocation3 [shape = 's32[1]{0}', space=sflag, size = 0x4, scoped, tag = 'scoped memory for tpu_custom_call.1']
    %8 = vsyncpa [#allocation3], 0
    // Predicated region
    $region2: #{tpu_custom_call.1} parent=1 // pred_check
      _
    $region3: #{tpu_custom_call.1} parent=1 // pred_check_branch
      %10 = sbr.rel (0) target = $region5
    $region4: #{tpu_custom_call.1} parent=1 // pred_region
      _
    $region5: #{tpu_custom_call.1} parent=1 // pred_fallthru
      _
    // Predicated region
    $region6: #{tpu_custom_call.1} parent=1 // pred_check
      _
    $region7: #{tpu_custom_call.1} parent=1 // pred_check_branch
      %12 = sbr.rel (0) target = $region9
    $region8: #{tpu_custom_call.1} parent=1 // pred_region
      _
    $region9: #{tpu_custom_call.1} parent=1 // pred_fallthru
      _
    // Predicated region
    $region10: #{tpu_custom_call.1} parent=1 // pred_check
      _
    $region11: #{tpu_custom_call.1} parent=1 // pred_check_branch
      %14 = sbr.rel (0) target = $region13
    $region12: #{tpu_custom_call.1} parent=1 // pred_region
      _
    $region13: #{tpu_custom_call.1} parent=1 // pred_fallthru
      _
    %v15 = vld [vmem:[%s0] sm:$0xff]
    %v16 = vld [vmem:[%s1] sm:$0xf]
    %18 = vset.pattern.permute.xlu0 0
    %19 = vperm.xlu0 %18, %v15
    %v20 = vpop.permute.xlu0 %19
    %v22 = vlaneseq
    %v23 = vshrl.u32 %v22, 7
    %v24 = vsub.s32 0, %v23
    %v25 = vrot.slane %v16, %v24
    %v26 = vmul.f32 %v20, %v25
    %27 = vset.pattern.permute.xlu0 1
    %28 = vperm.xlu0 %27, %v15
    %v29 = vpop.permute.xlu0 %28
    %v31 = vlaneseq
    %v32 = vshrl.u32 %v31, 7
    %v33 = vsub.s32 1, %v32
    %v34 = vrot.slane %v16, %v33
    %v35 = vmul.f32 %v29, %v34
    %v36 = vadd.f32 %v26, %v35
    %37 = vset.pattern.permute.xlu0 2
    %38 = vperm.xlu0 %37, %v15
    %v39 = vpop.permute.xlu0 %38
    %v41 = vlaneseq
    %v42 = vshrl.u32 %v41, 7
    %v43 = vsub.s32 2, %v42
    %v44 = vrot.slane %v16, %v43
    %v45 = vmul.f32 %v39, %v44
    %v46 = vadd.f32 %v36, %v45
    %47 = vset.pattern.permute.xlu0 3
    %48 = vperm.xlu0 %47, %v15
    %v49 = vpop.permute.xlu0 %48
    %v51 = vlaneseq
    %v52 = vshrl.u32 %v51, 7
    %v53 = vsub.s32 3, %v52
    %v54 = vrot.slane %v16, %v53
    %v55 = vmul.f32 %v49, %v54
    %v56 = vadd.f32 %v46, %v55
    %v57 = vld [vmem:[%s2] sm:$0x1]
    %v59 = vlaneseq
    %v60 = vshrl.u32 %v59, 7
    %v61 = vsub.s32 0, %v60
    %v62 = vrot.slane %v57, %v61
    %v64 = vadd.f32 %v56, %v62
    %v65 = vand.u32 2147483647, %v64
    %vm66 = vcmp.le.f32.partialorder %v65, 0.7853982
    %vm67 = vcmp.lt.s32.totalorder %v64, 0
    %v68 = vand.u32 %v64, 2139095040
    %v69 = vshrl.u32 %v68, 23
    %v70 = vsub.s32 %v69, 127
    %v71 = vand.u32 2147483647, %v64
    %v72 = vand.u32 %v71, 8388607
    %v73 = vor.u32 %v72, 8388608
    %v74 = vsub.s32 0, %v73
    %v75 = vadd.s32 %v70, 1
    %vm76 = vcmp.gt.s32.totalorder %v75, 0
    %v77 = vsel %vm76, %v75, 0
    %v78 = vshrl.u32 %v77, 5
    %v79 = vand.u32 %v77, 31
    %v80 = vsub.s32 32, %v79
    %v81 = vshrl.u32 683565275, %v80
    %v82 = vshll.u32 683565275, %v79
    %v83 = vshrl.u32 2475754826, %v80
    %v84 = vor.u32 %v82, %v83
    %v85 = vshll.u32 2475754826, %v79
    %v86 = vshrl.u32 2131351028, %v80
    %v87 = vor.u32 %v85, %v86
    %v88 = vshll.u32 2131351028, %v79
    %v89 = vshrl.u32 2102212464, %v80
    %v90 = vor.u32 %v88, %v89
    %v91 = vshll.u32 2102212464, %v79
    %v92 = vshrl.u32 920167782, %v80
    %v93 = vor.u32 %v91, %v92
    %v94 = vshll.u32 920167782, %v79
    %v95 = vshrl.u32 1326507024, %v80
    %v96 = vor.u32 %v94, %v95
    %vm97 = vcmp.lt.s32.totalorder %v78, 1
    %vm98 = vcmp.lt.s32.totalorder %v78, 2
    %vm99 = vcmp.lt.s32.totalorder %v78, 3
    %vm100 = vcmp.lt.s32.totalorder %v78, 4
    %v101 = vsel %vm97, %v81, %v84
    %v102 = vsel %vm100, %v90, 2102212464
    %v103 = vsel %vm99, %v87, %v102
    %v104 = vsel %vm98, %v101, %v103
    %v105 = vsel %vm97, %v84, %v87
    %v106 = vsel %vm100, %v93, 920167782
    %v107 = vsel %vm99, %v90, %v106
    %v108 = vsel %vm98, %v105, %v107
    %v109 = vsel %vm97, %v87, %v90
    %v110 = vsel %vm100, %v96, 1326507024
    %v111 = vsel %vm99, %v93, %v110
    %v112 = vsel %vm98, %v109, %v111
    %v113 = vshll.u32 %v73, 8
    %v114 = vmul.u32.u64.compose %v113, %v112
    %v115 = vextract.low.u32 %v114
    %v116 = vextract.high.u32 %v114
    %v117 = vmul.u32.u64.compose %v113, %v108
    %v118 = vextract.low.u32 %v117
    %v119 = vextract.high.u32 %v117
    %v120 = vmul.u32 %v113, %v104
    %v121 = vadd.s32 %v116, %v118
    %vm122 = vc.u32 %v116, %v118
    %v123 = vadd.s32 %v119, 1
    %v124 = vsel %vm122, %v123, %v119
    %v125 = vadd.s32 %v120, %v124
    %v126 = vadd.s32 %v125, 536870912
    %v127 = vshrl.u32 %v126, 30
    %v128 = vshll.u32 %v127, 30
    %v129 = vsub.s32 %v125, %v128
    %vm130 = vcmp.lt.s32.totalorder %v129, 0
    %v131 = vsub.s32 0, %v129
    %v132 = vsel %vm130, %v131, %v129
    %v133 = vclz %v132
    %v134 = vsub.s32 %v133, 2
    %vm135 = vcmp.gt.s32.totalorder 0, %v134
    %v136 = vsel %vm135, 0, %v134
    %v137 = vsub.s32 32, %v136
    %v138 = vshll.u32 %v129, %v136
    %v139 = vshrl.u32 %v121, %v137
    %v140 = vor.u32 %v138, %v139
    %v141 = vsub.s32 4294967266, %v136
    %v142 = vadd.s32 %v141, 127
    %v143 = vshll.u32 %v142, 23
    %v144 = vor.u32 4788187, %v143
    %v145 = vand.u32 2147483647, %v144
    %v147 = vcvt.s32.f32 %v140
    %v148 = vmul.f32 %v147, %v145
    %v149 = vxor.u32 %v148, 2147483648
    %v150 = vsel %vm67, %v149, %v148
    %v151 = vsub.s32 4, %v127
    %v152 = vsel %vm67, %v151, %v127
    %v153 = vsel %vm66, %v64, %v150
    %v154 = vsel %vm66, 0, %v152
    %v155 = vcosq.f32.pop %v153
    %v156 = vsinq.f32.pop %v153
    %vm157 = vweird.f32 %v64
    %v158 = vadd.s32 %v154, 3
    %v159 = vand.u32 %v158, 3
    %vm160 = vcmp.lt.s32.totalorder %v159, 2
    %vm161 = vcmp.eq.s32.totalorder %v159, 0
    %v162 = vxor.u32 %v156, 2147483648
    %v163 = vsel %vm161, %v155, %v162
    %vm164 = vcmp.eq.s32.totalorder %v159, 2
    %v165 = vxor.u32 %v155, 2147483648
    %v166 = vsel %vm164, %v165, %v156
    %v167 = vsel %vm160, %v163, %v166
    %v168 = vsel %vm157, nan, %v167
    %169 = vst [vmem:[#allocation2] sm:$0xff] %v168
    // Predicated region
    $region14: #{tpu_custom_call.1} parent=1 // pred_check
      _
    $region15: #{tpu_custom_call.1} parent=1 // pred_check_branch
      %171 = sbr.rel (0) target = $region17
    $region16: #{tpu_custom_call.1} parent=1 // pred_region
      %s173 = ssub.s32 128, 128
      %174 = vsyncadd [#allocation3], %s173
      %s176 = sshll.u32 [#allocation2], 4
      %s177 = int_to_ptr.vmem [resolvable:$true] %s176
      %179 = dma.vmem_to_hbm [thread:$0]  %s177, 128, %s3, [#allocation3]
    $region17: #{tpu_custom_call.1} parent=1 // pred_fallthru
      _
    // Predicated region
    $region18: #{tpu_custom_call.1} parent=1 // pred_check
      _
    $region19: #{tpu_custom_call.1} parent=1 // pred_check_branch
      %181 = sbr.rel (0) target = $region21
    $region20: #{tpu_custom_call.1} parent=1 // pred_region
      %182 = dma.done [#allocation3], 128
    $region21: #{tpu_custom_call.1} parent=1 // pred_fallthru
      _
    %183 = vsyncpa [#allocation3], 1

</llo_original>
